<compile_context>
chip_gen: v6e
topology: v6e:2x2x1
jax: 0.10.0
libtpu: 0.0.40
codegen_flags: <defaults>
</compile_context>

<pallas_src>
import jax
import jax.numpy as jnp
from jax.experimental import pallas as pl
from jax.experimental.pallas import tpu as pltpu


def _round_up(x, m):
    return ((x + m - 1) // m) * m


def _dmhnn_kernel(
    flow_ref, pkt_ref,           # (TB, Df) bf16, (TB, Dp) bf16   batch-tiled activations
    wsf_ref, wsp_ref,            # (1, Df) f32, (1, Dp) f32       similarity rows (resident)
    wa_f_ref, wa_p_ref,          # (Df, H) bf16, (Dp, H) bf16     fusion_fc @ (Linear1 ∘ BN), split
    ba_ref,                      # (1, H) f32                     folded bias
    w2_ref, b2_ref,              # (H, C) bf16, (1, C) f32        Linear2
    alpha_ref,                   # SMEM (2,) f32                  [alpha_flow, alpha_pkt]
    out_ref,                     # (TB, C) f32
):
    f32 = jnp.float32
    bf16 = jnp.bfloat16

    flow = flow_ref[...].astype(f32)                           # gating math in f32 (VPU)
    pkt = pkt_ref[...].astype(f32)

    # ---- similarity logits: VPU multiply + lane reduce (keeps the MXU free) ----
    sf = jnp.sum(flow * wsf_ref[...], axis=-1, keepdims=True)  # (TB, 1)
    sp = jnp.sum(pkt * wsp_ref[...], axis=-1, keepdims=True)   # (TB, 1)

    # ---- gating: stabilized 2-way softmax, epsilon inside log as in reference ----
    m = jnp.maximum(sf, sp)
    ef = jnp.exp(sf - m)
    ep = jnp.exp(sp - m)
    inv = pl.reciprocal(ef + ep, approx=False)
    gate_flow = 1.0 + alpha_ref[0] * jnp.log(ef * inv + 1e-10)  # (TB, 1)
    gate_pkt = 1.0 + alpha_ref[1] * jnp.log(ep * inv + 1e-10)   # (TB, 1)

    flow_adj = (flow * gate_flow).astype(bf16)
    pkt_adj = (pkt * gate_pkt).astype(bf16)

    # ---- fusion_fc ∘ Linear1 ∘ BN collapsed into Wa / ba (folded host-side) ----
    h = (jnp.dot(flow_adj, wa_f_ref[...], preferred_element_type=f32)
         + jnp.dot(pkt_adj, wa_p_ref[...], preferred_element_type=f32)
         + ba_ref[...])
    h = jnp.maximum(h, 0.0)                                     # ReLU; Dropout(0.7)=identity (eval)

    # ---- Linear2 → narrow (TB, C) store ----
    out_ref[...] = (jnp.dot(h.astype(bf16), w2_ref[...], preferred_element_type=f32)
                    + b2_ref[...])


def prepare_kernel_params(params, flow_dim, pkt_dim):
    """Host-side, one-time folding:
       * eval-mode BatchNorm1d folded into Linear1,
       * fusion_fc composed with the folded Linear1 (no nonlinearity between),
       * weights cast to bf16 for native-rate MXU matmuls (biases stay f32)."""
    hidden = params["w1"].shape[1]
    num_classes = params["w2"].shape[1]

    # BatchNorm1d (eval): y = (h - rm) * gamma / sqrt(rv + 1e-5) + beta
    s = params["gamma"] * jax.lax.rsqrt(params["rv"] + 1e-5)    # (1, hidden)
    w1f = params["w1"] * s
    b1f = (params["b1"] - params["rm"]) * s + params["beta"]

    # fused = adjusted @ wfu + bfu ; h = fused @ w1f + b1f
    #       = adjusted @ (wfu @ w1f) + (bfu @ w1f + b1f)
    wa = params["wfu"] @ w1f                                    # (comb, hidden)  f32 fold
    ba = params["bfu"] @ w1f + b1f                              # (1, hidden)

    bf16 = jnp.bfloat16
    return {
        "alpha": params["alpha"].astype(jnp.float32),
        "wsf_row": params["wsf"].T.astype(jnp.float32),         # (1, flow_dim)
        "wsp_row": params["wsp"].T.astype(jnp.float32),         # (1, pkt_dim)
        "wa_flow": wa[:flow_dim].astype(bf16),                  # (flow_dim, hidden)
        "wa_pkt": wa[flow_dim:].astype(bf16),                   # (pkt_dim, hidden)
        "ba": ba.astype(jnp.float32),                           # (1, hidden)
        "w2": params["w2"].astype(bf16),                        # (hidden, classes)
        "b2": params["b2"].astype(jnp.float32),                 # (1, classes)
        "flow_dim": flow_dim,
        "pkt_dim": pkt_dim,
        "hidden": hidden,
        "num_classes": num_classes,
    }


def dmhnn_forward(flow, pkt, kp, *, tile_b=1024):
    """Batch-tiled Pallas forward pass. Activations are consumed in bf16
    (ideally supplied bf16 upstream); gating math stays f32 inside the kernel."""
    B = flow.shape[0]
    fd, pd = kp["flow_dim"], kp["pkt_dim"]
    hid, nc = kp["hidden"], kp["num_classes"]

    flow = flow.astype(jnp.bfloat16)
    pkt = pkt.astype(jnp.bfloat16)

    # pad batch only to a sublane multiple (not to a tile multiple)
    b_pad = _round_up(B, 8)
    if b_pad != B:
        flow = jnp.pad(flow, ((0, b_pad - B), (0, 0)))
        pkt = jnp.pad(pkt, ((0, b_pad - B), (0, 0)))

    tb = min(tile_b, b_pad)
    if tb == b_pad and b_pad >= 16:
        # ensure >= 2 grid steps so the "parallel" axis engages both TCs on v7x
        tb = _round_up((b_pad + 1) // 2, 8)
    grid = pl.cdiv(b_pad, tb)   # ragged last block is fine: rows are independent

    flops = 2 * b_pad * ((fd + pd) * hid + hid * nc) + 8 * b_pad * (fd + pd)
    bytes_acc = (b_pad * (fd + pd) * 2                      # bf16 activation read
                 + b_pad * nc * 4                           # f32 logits written
                 + ((fd + pd) * hid + hid * nc) * 2         # bf16 weights
                 + (fd + pd + hid + nc + 2) * 4)            # f32 rows / biases / alpha

    out_padded = pl.pallas_call(
        _dmhnn_kernel,
        out_shape=jax.ShapeDtypeStruct((b_pad, nc), jnp.float32),
        grid=(grid,),
        in_specs=[
            pl.BlockSpec((tb, fd), lambda i: (i, 0)),            # flow (batch-tiled)
            pl.BlockSpec((tb, pd), lambda i: (i, 0)),            # pkt  (batch-tiled)
            pl.BlockSpec((1, fd), lambda i: (0, 0)),             # similarity row (flow)
            pl.BlockSpec((1, pd), lambda i: (0, 0)),             # similarity row (pkt)
            pl.BlockSpec((fd, hid), lambda i: (0, 0)),           # Wa_flow (resident)
            pl.BlockSpec((pd, hid), lambda i: (0, 0)),           # Wa_pkt  (resident)
            pl.BlockSpec((1, hid), lambda i: (0, 0)),            # ba
            pl.BlockSpec((hid, nc), lambda i: (0, 0)),           # w2
            pl.BlockSpec((1, nc), lambda i: (0, 0)),             # b2
            pl.BlockSpec(memory_space=pltpu.MemorySpace.SMEM),   # alpha scalars
        ],
        out_specs=pl.BlockSpec((tb, nc), lambda i: (i, 0)),
        compiler_params=pltpu.CompilerParams(
            dimension_semantics=("parallel",),                   # megacore on v7x
        ),
        cost_estimate=pl.CostEstimate(
            flops=int(flops),
            transcendentals=int(4 * b_pad),
            bytes_accessed=int(bytes_acc),
        ),
    )(flow, pkt, kp["wsf_row"], kp["wsp_row"], kp["wa_flow"], kp["wa_pkt"],
      kp["ba"], kp["w2"], kp["b2"], kp["alpha"])

    return out_padded[:B]


def make_params(key, flow_dim, pkt_dim, hidden_dim, num_classes):
    """Deterministic synthetic parameters (PyTorch-shaped, linears pre-transposed).

    NOTE: prefusion_fc / Tanh parameters exist in the PyTorch module but their
    output `F` is never consumed by forward(), so they are dead code and are
    not generated / not passed to the kernel."""
    keys = jax.random.split(key, 10)
    scale = 0.1
    comb = flow_dim + pkt_dim

    def lin(k, n_in, n_out):
        return scale * jax.random.normal(k, (n_in, n_out), jnp.float32)

    return {
        "wsf": lin(keys[0], flow_dim, 1),                     # similarity_fc_flow (no bias)
        "wsp": lin(keys[1], pkt_dim, 1),                      # similarity_fc_pkt (no bias)
        "wfu": lin(keys[2], comb, hidden_dim),                # fusion_fc
        "bfu": scale * jax.random.normal(keys[3], (1, hidden_dim), jnp.float32),
        "w1": lin(keys[4], hidden_dim, hidden_dim),
        "b1": scale * jax.random.normal(keys[5], (1, hidden_dim), jnp.float32),
        "gamma": 1.0 + 0.05 * jax.random.normal(keys[6], (1, hidden_dim), jnp.float32),
        "beta": 0.05 * jax.random.normal(keys[7], (1, hidden_dim), jnp.float32),
        "rm": 0.05 * jax.random.normal(keys[8], (1, hidden_dim), jnp.float32),
        "rv": 1.0 + 0.05 * jnp.abs(jax.random.normal(keys[9], (1, hidden_dim), jnp.float32)),
        "w2": lin(jax.random.fold_in(key, 99), hidden_dim, num_classes),
        "b2": scale * jax.random.normal(jax.random.fold_in(key, 100),
                                        (1, num_classes), jnp.float32),
        "alpha": jnp.array([0.1, 0.1], jnp.float32),          # alpha_flow, alpha_pkt
    }


def dmhnn_reference(flow, pkt, p):
    """Pure-JAX f32 reference mirroring the PyTorch forward (eval mode)."""
    sf = flow @ p["wsf"]
    sp = pkt @ p["wsp"]
    ef, ep = jnp.exp(sf), jnp.exp(sp)
    es = ef + ep
    i_f = ef / (es + 1e-10)
    i_p = ep / (es + 1e-10)
    flow_adj = flow * (1.0 + p["alpha"][0] * jnp.log(i_f + 1e-10))
    pkt_adj = pkt * (1.0 + p["alpha"][1] * jnp.log(i_p + 1e-10))
    adjusted = jnp.concatenate([flow_adj, pkt_adj], axis=1)
    fused = adjusted @ p["wfu"] + p["bfu"]
    h = fused @ p["w1"] + p["b1"]
    h = (h - p["rm"]) * p["gamma"] / jnp.sqrt(p["rv"] + 1e-5) + p["beta"]
    h = jnp.maximum(h, 0.0)            # ReLU; Dropout(0.7) is identity in eval
    return h @ p["w2"] + p["b2"]


if __name__ == "__main__":
    flow_dim, pkt_dim, hidden_dim, num_classes = 32, 32, 32, 8
    batch = 8

    key = jax.random.PRNGKey(0)
    k_flow, k_pkt, k_param = jax.random.split(key, 3)
    flow = jax.random.normal(k_flow, (batch, flow_dim), jnp.float32)
    pkt = jax.random.normal(k_pkt, (batch, pkt_dim), jnp.float32)

    params = make_params(k_param, flow_dim, pkt_dim, hidden_dim, num_classes)
    kparams = prepare_kernel_params(params, flow_dim, pkt_dim)

    out = dmhnn_forward(flow, pkt, kparams)
    out = jax.block_until_ready(out)

    ref = dmhnn_reference(flow, pkt, params)
    assert out.shape == (batch, num_classes)
    # bf16 matmul operands + host-side matrix fold => relaxed (but tight-for-bf16)
    # tolerance vs. the f32 reference.
    max_err = jnp.max(jnp.abs(out - ref))
    assert jnp.allclose(out, ref, atol=2e-2, rtol=2e-2), (
        f"mismatch: max abs err = {max_err}")

    print("KERNEL_OK")
</pallas_src>

<mosaic_0001>
module attributes {stable_mosaic.version = 11 : i64} {
  func.func @_dmhnn_kernel(%arg0: i32, %arg1: memref<8x32xbf16, #tpu.memory_space<vmem>>, %arg2: memref<8x32xbf16, #tpu.memory_space<vmem>>, %arg3: memref<1x32xf32, #tpu.memory_space<vmem>>, %arg4: memref<1x32xf32, #tpu.memory_space<vmem>>, %arg5: memref<32x32xbf16, #tpu.memory_space<vmem>>, %arg6: memref<32x32xbf16, #tpu.memory_space<vmem>>, %arg7: memref<1x32xf32, #tpu.memory_space<vmem>>, %arg8: memref<32x8xbf16, #tpu.memory_space<vmem>>, %arg9: memref<1x8xf32, #tpu.memory_space<vmem>>, %arg10: memref<2xf32, #tpu.memory_space<smem>>, %arg11: memref<8x8xf32, #tpu.memory_space<vmem>>) attributes {dimension_semantics = [#tpu.dimension_semantics<parallel>], iteration_bounds = array<i64: 1>, scalar_prefetch = 0 : i64, scratch_operands = 0 : i64, tpu.core_type = #tpu.core_type<tc>, window_params = [{transform_indices = @transform_0, window_bounds = array<i64: 8, 32>}, {transform_indices = @transform_1, window_bounds = array<i64: 8, 32>}, {pipeline_mode = #tpu.pipeline_mode<synchronous>, transform_indices = @transform_2, window_bounds = array<i64: 1, 32>}, {pipeline_mode = #tpu.pipeline_mode<synchronous>, transform_indices = @transform_3, window_bounds = array<i64: 1, 32>}, {pipeline_mode = #tpu.pipeline_mode<synchronous>, transform_indices = @transform_4, window_bounds = array<i64: 32, 32>}, {pipeline_mode = #tpu.pipeline_mode<synchronous>, transform_indices = @transform_5, window_bounds = array<i64: 32, 32>}, {pipeline_mode = #tpu.pipeline_mode<synchronous>, transform_indices = @transform_6, window_bounds = array<i64: 1, 32>}, {pipeline_mode = #tpu.pipeline_mode<synchronous>, transform_indices = @transform_7, window_bounds = array<i64: 32, 8>}, {pipeline_mode = #tpu.pipeline_mode<synchronous>, transform_indices = @transform_8, window_bounds = array<i64: 1, 8>}, {transform_indices = @transform_9, window_bounds = array<i64: 2>}, {transform_indices = @transform_10, window_bounds = array<i64: 8, 8>}]} {
    %c0 = arith.constant 0 : index
    %c0_0 = arith.constant 0 : index
    %0 = vector.load %arg1[%c0, %c0_0] : memref<8x32xbf16, #tpu.memory_space<vmem>>, vector<8x32xbf16>
    %1 = arith.extf %0 : vector<8x32xbf16> to vector<8x32xf32>
    %c0_1 = arith.constant 0 : index
    %c0_2 = arith.constant 0 : index
    %2 = vector.load %arg2[%c0_1, %c0_2] : memref<8x32xbf16, #tpu.memory_space<vmem>>, vector<8x32xbf16>
    %3 = arith.extf %2 : vector<8x32xbf16> to vector<8x32xf32>
    %c0_3 = arith.constant 0 : index
    %c0_4 = arith.constant 0 : index
    %4 = vector.load %arg3[%c0_3, %c0_4] : memref<1x32xf32, #tpu.memory_space<vmem>>, vector<1x32xf32>
    %5 = vector.broadcast %4 : vector<1x32xf32> to vector<8x32xf32>
    %6 = arith.mulf %1, %5 : vector<8x32xf32>
    %cst = arith.constant dense<0.000000e+00> : vector<8xf32>
    %7 = vector.multi_reduction <add>, %6, %cst [1] : vector<8x32xf32> to vector<8xf32>
    %8 = vector.shape_cast %7 : vector<8xf32> to vector<8x1xf32>
    %c0_5 = arith.constant 0 : index
    %c0_6 = arith.constant 0 : index
    %9 = vector.load %arg4[%c0_5, %c0_6] : memref<1x32xf32, #tpu.memory_space<vmem>>, vector<1x32xf32>
    %10 = vector.broadcast %9 : vector<1x32xf32> to vector<8x32xf32>
    %11 = arith.mulf %3, %10 : vector<8x32xf32>
    %cst_7 = arith.constant dense<0.000000e+00> : vector<8xf32>
    %12 = vector.multi_reduction <add>, %11, %cst_7 [1] : vector<8x32xf32> to vector<8xf32>
    %13 = vector.shape_cast %12 : vector<8xf32> to vector<8x1xf32>
    %14 = arith.maximumf %8, %13 : vector<8x1xf32>
    %15 = arith.subf %8, %14 : vector<8x1xf32>
    %16 = math.exp %15 : vector<8x1xf32>
    %17 = arith.subf %13, %14 : vector<8x1xf32>
    %18 = math.exp %17 : vector<8x1xf32>
    %19 = arith.addf %16, %18 : vector<8x1xf32>
    %20 = tpu.reciprocal %19 : vector<8x1xf32> -> vector<8x1xf32>
    %c0_8 = arith.constant 0 : index
    %21 = memref.load %arg10[%c0_8] : memref<2xf32, #tpu.memory_space<smem>>
    %22 = arith.mulf %16, %20 : vector<8x1xf32>
    %cst_9 = arith.constant 1.000000e-10 : f32
    %23 = vector.broadcast %cst_9 : f32 to vector<8x1xf32>
    %24 = arith.addf %22, %23 : vector<8x1xf32>
    %25 = math.log %24 : vector<8x1xf32>
    %26 = vector.broadcast %21 : f32 to vector<8x1xf32>
    %27 = arith.mulf %26, %25 : vector<8x1xf32>
    %cst_10 = arith.constant 1.000000e+00 : f32
    %28 = vector.broadcast %cst_10 : f32 to vector<8x1xf32>
    %29 = arith.addf %28, %27 : vector<8x1xf32>
    %c1 = arith.constant 1 : index
    %30 = memref.load %arg10[%c1] : memref<2xf32, #tpu.memory_space<smem>>
    %31 = arith.mulf %18, %20 : vector<8x1xf32>
    %cst_11 = arith.constant 1.000000e-10 : f32
    %32 = vector.broadcast %cst_11 : f32 to vector<8x1xf32>
    %33 = arith.addf %31, %32 : vector<8x1xf32>
    %34 = math.log %33 : vector<8x1xf32>
    %35 = vector.broadcast %30 : f32 to vector<8x1xf32>
    %36 = arith.mulf %35, %34 : vector<8x1xf32>
    %cst_12 = arith.constant 1.000000e+00 : f32
    %37 = vector.broadcast %cst_12 : f32 to vector<8x1xf32>
    %38 = arith.addf %37, %36 : vector<8x1xf32>
    %39 = vector.broadcast %29 : vector<8x1xf32> to vector<8x32xf32>
    %40 = arith.mulf %1, %39 : vector<8x32xf32>
    %41 = arith.truncf %40 : vector<8x32xf32> to vector<8x32xbf16>
    %42 = vector.broadcast %38 : vector<8x1xf32> to vector<8x32xf32>
    %43 = arith.mulf %3, %42 : vector<8x32xf32>
    %44 = arith.truncf %43 : vector<8x32xf32> to vector<8x32xbf16>
    %c0_13 = arith.constant 0 : index
    %c0_14 = arith.constant 0 : index
    %45 = vector.load %arg5[%c0_13, %c0_14] : memref<32x32xbf16, #tpu.memory_space<vmem>>, vector<32x32xbf16>
    %cst_15 = arith.constant dense<0.000000e+00> : vector<8x32xf32>
    %46 = tpu.matmul %41, %45, %cst_15 {dimension_numbers = #tpu.dot_dimension_numbers<[1], [0], [0], [1], [0, 0, 1, 1], [], []>} : vector<8x32xbf16>, vector<32x32xbf16>, vector<8x32xf32> -> vector<8x32xf32>
    %c0_16 = arith.constant 0 : index
    %c0_17 = arith.constant 0 : index
    %47 = vector.load %arg6[%c0_16, %c0_17] : memref<32x32xbf16, #tpu.memory_space<vmem>>, vector<32x32xbf16>
    %cst_18 = arith.constant dense<0.000000e+00> : vector<8x32xf32>
    %48 = tpu.matmul %44, %47, %cst_18 {dimension_numbers = #tpu.dot_dimension_numbers<[1], [0], [0], [1], [0, 0, 1, 1], [], []>} : vector<8x32xbf16>, vector<32x32xbf16>, vector<8x32xf32> -> vector<8x32xf32>
    %49 = arith.addf %46, %48 : vector<8x32xf32>
    %c0_19 = arith.constant 0 : index
    %c0_20 = arith.constant 0 : index
    %50 = vector.load %arg7[%c0_19, %c0_20] : memref<1x32xf32, #tpu.memory_space<vmem>>, vector<1x32xf32>
    %51 = vector.broadcast %50 : vector<1x32xf32> to vector<8x32xf32>
    %52 = arith.addf %49, %51 : vector<8x32xf32>
    %cst_21 = arith.constant 0.000000e+00 : f32
    %53 = vector.broadcast %cst_21 : f32 to vector<8x32xf32>
    %54 = arith.maximumf %52, %53 : vector<8x32xf32>
    %55 = arith.truncf %54 : vector<8x32xf32> to vector<8x32xbf16>
    %c0_22 = arith.constant 0 : index
    %c0_23 = arith.constant 0 : index
    %56 = vector.load %arg8[%c0_22, %c0_23] : memref<32x8xbf16, #tpu.memory_space<vmem>>, vector<32x8xbf16>
    %cst_24 = arith.constant dense<0.000000e+00> : vector<8x8xf32>
    %57 = tpu.matmul %55, %56, %cst_24 {dimension_numbers = #tpu.dot_dimension_numbers<[1], [0], [0], [1], [0, 0, 1, 1], [], []>} : vector<8x32xbf16>, vector<32x8xbf16>, vector<8x8xf32> -> vector<8x8xf32>
    %c0_25 = arith.constant 0 : index
    %c0_26 = arith.constant 0 : index
    %58 = vector.load %arg9[%c0_25, %c0_26] : memref<1x8xf32, #tpu.memory_space<vmem>>, vector<1x8xf32>
    %59 = vector.broadcast %58 : vector<1x8xf32> to vector<8x8xf32>
    %60 = arith.addf %57, %59 : vector<8x8xf32>
    %c0_27 = arith.constant 0 : index
    %c0_28 = arith.constant 0 : index
    %61 = vector.load %arg11[%c0_27, %c0_28] : memref<8x8xf32, #tpu.memory_space<vmem>>, vector<8x8xf32>
    tpu.vector_store %arg11[%c0_27, %c0_28], %60 {strides = array<i32>} : memref<8x8xf32, #tpu.memory_space<vmem>>, vector<8x8xf32>,
    return
  }
  func.func @transform_0(%arg0: i32) -> (i32, i32) {
    %c0_i32 = arith.constant 0 : i32
    %c0_i32_0 = arith.constant 0 : i32
    return %arg0, %c0_i32 : i32, i32
  }
  func.func @transform_1(%arg0: i32) -> (i32, i32) {
    %c0_i32 = arith.constant 0 : i32
    %c0_i32_0 = arith.constant 0 : i32
    return %arg0, %c0_i32 : i32, i32
  }
  func.func @transform_2(%arg0: i32) -> (i32, i32) {
    %c0_i32 = arith.constant 0 : i32
    %c0_i32_0 = arith.constant 0 : i32
    %c0_i32_1 = arith.constant 0 : i32
    return %c0_i32, %c0_i32_0 : i32, i32
  }
  func.func @transform_3(%arg0: i32) -> (i32, i32) {
    %c0_i32 = arith.constant 0 : i32
    %c0_i32_0 = arith.constant 0 : i32
    %c0_i32_1 = arith.constant 0 : i32
    return %c0_i32, %c0_i32_0 : i32, i32
  }
  func.func @transform_4(%arg0: i32) -> (i32, i32) {
    %c0_i32 = arith.constant 0 : i32
    %c0_i32_0 = arith.constant 0 : i32
    %c0_i32_1 = arith.constant 0 : i32
    return %c0_i32, %c0_i32_0 : i32, i32
  }
  func.func @transform_5(%arg0: i32) -> (i32, i32) {
    %c0_i32 = arith.constant 0 : i32
    %c0_i32_0 = arith.constant 0 : i32
    %c0_i32_1 = arith.constant 0 : i32
    return %c0_i32, %c0_i32_0 : i32, i32
  }
  func.func @transform_6(%arg0: i32) -> (i32, i32) {
    %c0_i32 = arith.constant 0 : i32
    %c0_i32_0 = arith.constant 0 : i32
    %c0_i32_1 = arith.constant 0 : i32
    return %c0_i32, %c0_i32_0 : i32, i32
  }
  func.func @transform_7(%arg0: i32) -> (i32, i32) {
    %c0_i32 = arith.constant 0 : i32
    %c0_i32_0 = arith.constant 0 : i32
    %c0_i32_1 = arith.constant 0 : i32
    return %c0_i32, %c0_i32_0 : i32, i32
  }
  func.func @transform_8(%arg0: i32) -> (i32, i32) {
    %c0_i32 = arith.constant 0 : i32
    %c0_i32_0 = arith.constant 0 : i32
    %c0_i32_1 = arith.constant 0 : i32
    return %c0_i32, %c0_i32_0 : i32, i32
  }
  func.func @transform_9(%arg0: i32) -> i32 {
    %c0_i32 = arith.constant 0 : i32
    %c0_i32_0 = arith.constant 0 : i32
    return %c0_i32 : i32
  }
  func.func @transform_10(%arg0: i32) -> (i32, i32) {
    %c0_i32 = arith.constant 0 : i32
    %c0_i32_0 = arith.constant 0 : i32
    return %arg0, %c0_i32 : i32, i32
  }
}

</mosaic_0001>

<llo_original>
// kernel: tpu_custom_call.1
$region0: #{tpu_custom_call.1}
  #allocation0 [shape = 'u32[]', space=smem, size = 0x4, offset = 0x4, fixed_abs, tag = 'smem constant byte address 0x4 - core index']
  #allocation1 [shape = 'u32[144,128]{1,0:T(1,128)}', space=vmem, size = 0x12000, scoped, tag = 'internal scratch']
  %s0 = inlined_call_operand.vmem [shape: bf16[8,32], index: 0, kind: input, shape index: {}]
  %s1 = inlined_call_operand.vmem [shape: bf16[8,32], index: 1, kind: input, shape index: {}]
  %s2 = inlined_call_operand.vmem [shape: f32[1,32], index: 2, kind: input, shape index: {}]
  %s3 = inlined_call_operand.hbm [shape: f32[1,32], index: 3, kind: input, shape index: {}]
  %s4 = inlined_call_operand.vmem [shape: bf16[32,32], index: 4, kind: input, shape index: {}]
  %s5 = inlined_call_operand.hbm [shape: bf16[32,32], index: 5, kind: input, shape index: {}]
  %s6 = inlined_call_operand.vmem [shape: f32[1,32], index: 6, kind: input, shape index: {}]
  %s7 = inlined_call_operand.vmem [shape: bf16[32,8], index: 7, kind: input, shape index: {}]
  %s8 = inlined_call_operand.vmem [shape: f32[1,8], index: 8, kind: input, shape index: {}]
  %s9 = inlined_call_operand.vmem [shape: f32[2], index: 9, kind: input, shape index: {}]
  %s10 = inlined_call_operand.hbm [shape: f32[8,8], index: 10, kind: output, shape index: {}]
  %s11 = sld [smem:[#allocation0]]
  $region62: #{tpu_custom_call.1} parent=0
    _
  %s13 = ssub.s32 1, %s11
  %s14 = scalar_select 0, %s13, %s11
  $region1: #{tpu_custom_call.1} parent=0
    #allocation2 [shape = 'u8[512]{0}', space=vmem, size = 0x400, scoped, tag = 'input window, operand 3, single buffered']
    #allocation3 [shape = 's32[1]{0}', space=sflag, size = 0x4, scoped, tag = 'scoped memory for tpu_custom_call.1']
    #allocation4 [shape = 's32[1]{0}', space=sflag, size = 0x4, scoped, tag = 'scoped memory for tpu_custom_call.1']
    #allocation5 [shape = 's32[1]{0}', space=sflag, size = 0x4, scoped, tag = 'scoped memory for tpu_custom_call.1']
    #allocation6 [shape = 'u8[8192]{0}', space=vmem, size = 0x2000, scoped, tag = 'input window, operand 5, single buffered']
    #allocation7 [shape = 's32[1]{0}', space=sflag, size = 0x4, scoped, tag = 'scoped memory for tpu_custom_call.1']
    #allocation8 [shape = 'u8[512]{0}', space=smem, size = 0x200, scoped, tag = 'input window, operand 9, single buffered']
    #allocation9 [shape = 'u8[4096]{0}', space=vmem, size = 0x1000, scoped, tag = 'output window, operand 0, single buffered']
    %15 = vsyncpa [#allocation3], 0
    %16 = vsyncpa [#allocation7], 0
    %17 = vsyncpa [#allocation5], 0
    %18 = vsyncpa [#allocation4], 0
    // Predicated region
    $region2: #{tpu_custom_call.1} parent=1 // pred_check
      _
    $region3: #{tpu_custom_call.1} parent=1 // pred_check_branch
      %20 = sbr.rel (0) target = $region5
    $region4: #{tpu_custom_call.1} parent=1 // pred_region
      _
    $region5: #{tpu_custom_call.1} parent=1 // pred_fallthru
      _
    // Predicated region
    $region6: #{tpu_custom_call.1} parent=1 // pred_check
      _
    $region7: #{tpu_custom_call.1} parent=1 // pred_check_branch
      %22 = sbr.rel (0) target = $region9
    $region8: #{tpu_custom_call.1} parent=1 // pred_region
      _
    $region9: #{tpu_custom_call.1} parent=1 // pred_fallthru
      _
    // Predicated region
    $region10: #{tpu_custom_call.1} parent=1 // pred_check
      _
    $region11: #{tpu_custom_call.1} parent=1 // pred_check_branch
      %24 = sbr.rel (0) target = $region13
    $region12: #{tpu_custom_call.1} parent=1 // pred_region
      _
    $region13: #{tpu_custom_call.1} parent=1 // pred_fallthru
      _
    // Predicated region
    $region14: #{tpu_custom_call.1} parent=1 // pred_check
      _
    $region15: #{tpu_custom_call.1} parent=1 // pred_check_branch
      %26 = sbr.rel (0) target = $region17
    $region16: #{tpu_custom_call.1} parent=1 // pred_region
      %s28 = ssub.s32 16, 16
      %29 = vsyncadd [#allocation3], %s28
      %s31 = sshll.u32 [#allocation2], 4
      %s32 = int_to_ptr.vmem [resolvable:$true] %s31
      %34 = dma.hbm_to_vmem [thread:$0]  %s3, 16, %s32, [#allocation3]
    $region17: #{tpu_custom_call.1} parent=1 // pred_fallthru
      _
    // Predicated region
    $region18: #{tpu_custom_call.1} parent=1 // pred_check
      _
    $region19: #{tpu_custom_call.1} parent=1 // pred_check_branch
      %36 = sbr.rel (0) target = $region21
    $region20: #{tpu_custom_call.1} parent=1 // pred_region
      _
    $region21: #{tpu_custom_call.1} parent=1 // pred_fallthru
      _
    // Predicated region
    $region22: #{tpu_custom_call.1} parent=1 // pred_check
      _
    $region23: #{tpu_custom_call.1} parent=1 // pred_check_branch
      %38 = sbr.rel (0) target = $region25
    $region24: #{tpu_custom_call.1} parent=1 // pred_region
      %s40 = ssub.s32 256, 256
      %41 = vsyncadd [#allocation7], %s40
      %s42 = sshll.u32 [#allocation6], 4
      %s43 = int_to_ptr.vmem [resolvable:$true] %s42
      %48 = dma.hbm_to_vmem [thread:$0]  %s5, 256, %s43, [#allocation7], 64, 64, 4
    $region25: #{tpu_custom_call.1} parent=1 // pred_fallthru
      _
    // Predicated region
    $region26: #{tpu_custom_call.1} parent=1 // pred_check
      _
    $region27: #{tpu_custom_call.1} parent=1 // pred_check_branch
      %50 = sbr.rel (0) target = $region29
    $region28: #{tpu_custom_call.1} parent=1 // pred_region
      _
    $region29: #{tpu_custom_call.1} parent=1 // pred_fallthru
      _
    // Predicated region
    $region30: #{tpu_custom_call.1} parent=1 // pred_check
      _
    $region31: #{tpu_custom_call.1} parent=1 // pred_check_branch
      %52 = sbr.rel (0) target = $region33
    $region32: #{tpu_custom_call.1} parent=1 // pred_region
      _
    $region33: #{tpu_custom_call.1} parent=1 // pred_fallthru
      _
    // Predicated region
    $region34: #{tpu_custom_call.1} parent=1 // pred_check
      _
    $region35: #{tpu_custom_call.1} parent=1 // pred_check_branch
      %54 = sbr.rel (0) target = $region37
    $region36: #{tpu_custom_call.1} parent=1 // pred_region
      _
    $region37: #{tpu_custom_call.1} parent=1 // pred_fallthru
      _
    // Predicated region
    $region38: #{tpu_custom_call.1} parent=1 // pred_check
      _
    $region39: #{tpu_custom_call.1} parent=1 // pred_check_branch
      %56 = sbr.rel (0) target = $region41
    $region40: #{tpu_custom_call.1} parent=1 // pred_region
      %s58 = ssub.s32 16, 16
      %59 = vsyncadd [#allocation5], %s58
      %s61 = sshll.u32 %s9, 4
      %s62 = int_to_ptr.vmem [resolvable:$true] %s61
      %64 = dma.vmem_to_smem %s62, 16, [#allocation8], [#allocation5]
    $region41: #{tpu_custom_call.1} parent=1 // pred_fallthru
      _
    // Predicated region
    $region42: #{tpu_custom_call.1} parent=1 // pred_check
      _
    $region43: #{tpu_custom_call.1} parent=1 // pred_check_branch
      %66 = sbr.rel (0) target = $region45
    $region44: #{tpu_custom_call.1} parent=1 // pred_region
      %67 = dma.done [#allocation3], 16
    $region45: #{tpu_custom_call.1} parent=1 // pred_fallthru
      _
    // Predicated region
    $region46: #{tpu_custom_call.1} parent=1 // pred_check
      _
    $region47: #{tpu_custom_call.1} parent=1 // pred_check_branch
      %69 = sbr.rel (0) target = $region49
    $region48: #{tpu_custom_call.1} parent=1 // pred_region
      %70 = dma.done [#allocation7], 256
    $region49: #{tpu_custom_call.1} parent=1 // pred_fallthru
      _
    // Predicated region
    $region50: #{tpu_custom_call.1} parent=1 // pred_check
      _
    $region51: #{tpu_custom_call.1} parent=1 // pred_check_branch
      %72 = sbr.rel (0) target = $region53
    $region52: #{tpu_custom_call.1} parent=1 // pred_region
      %73 = dma.done [#allocation5], 16
    $region53: #{tpu_custom_call.1} parent=1 // pred_fallthru
      _
    %74 = sfence
    %v76 = vld [vmem:[%s0] sm:$0xf]
    %v77 = vunpack.c.l.bf16 %v76
    %v78 = vld [vmem:[%s1] sm:$0xf]
    %v79 = vunpack.c.l.bf16 %v78
    %v80 = vld [vmem:[%s2] sm:$0x1]
    %v82 = vlaneseq
    %v83 = vshrl.u32 %v82, 7
    %v84 = vsub.s32 0, %v83
    %v85 = vrot.slane %v80, %v84
    %v87 = vmul.f32 %v77, %v85
    %vm88 = vcmask 261120
    %v89 = vsel %vm88, %v87, 0.0
    %90 = vadd.xlane.f32.xlu0 %v89
    %v91 = vpop.xlane.xlu0 %90
    %v92 = vld [vmem:[#allocation2] sm:$0x1]
    %v94 = vlaneseq
    %v95 = vshrl.u32 %v94, 7
    %v96 = vsub.s32 0, %v95
    %v97 = vrot.slane %v92, %v96
    %v99 = vmul.f32 %v79, %v97
    %v100 = vsel %vm88, %v99, 0.0
    %101 = vadd.xlane.f32.xlu0 %v100
    %v102 = vpop.xlane.xlu0 %101
    %v103 = vmax.f32 %v91, %v102
    %v104 = vsub.f32 %v91, %v103
    %v105 = vmul.f32 %v104, 1.442695
    %v106 = vpow.pop %v105
    %v107 = vsub.f32 %v102, %v103
    %v108 = vmul.f32 %v107, 1.442695
    %v109 = vpow.pop %v108
    %v110 = vadd.f32 %v106, %v109
    %v111 = vrcp.pop %v110
    %s112 = sld [smem:[#allocation8]]
    %v113 = vmul.f32 %v106, %v111
    %v114 = vadd.f32 %v113, 1e-10
    %v115 = vlog2.pop %v114
    %v116 = vmul.f32 %v115, 0.6931472
    %v117 = vstv %s112
    %v118 = vmul.f32 %v117, %v116
    %v119 = vadd.f32 %v118, 1.0
    %s120 = sld [smem:[#allocation8 + $0x1]]
    %v121 = vmul.f32 %v109, %v111
    %v122 = vadd.f32 %v121, 1e-10
    %v123 = vlog2.pop %v122
    %v124 = vmul.f32 %v123, 0.6931472
    %v125 = vstv %s120
    %v126 = vmul.f32 %v125, %v124
    %v127 = vadd.f32 %v126, 1.0
    %v128 = vmul.f32 %v77, %v119
    %v129 = vpack.c.bf16 %v128, %v128
    %v130 = vmul.f32 %v79, %v127
    %v131 = vpack.c.bf16 %v130, %v130
    %v132 = vld [vmem:[%s4] sm:$0xf]
    %v133 = vld [vmem:[%s4 + $0x4] sm:$0xf]
    %v134 = vld [vmem:[%s4 + $0x8] sm:$0xf]
    %v135 = vld [vmem:[%s4 + $0xc] sm:$0xf]
    %v136 = vld [vmem:[#allocation6] sm:$0xf]
    %v137 = vld [vmem:[#allocation6 + $0x4] sm:$0xf]
    %v138 = vld [vmem:[#allocation6 + $0x8] sm:$0xf]
    %v139 = vld [vmem:[#allocation6 + $0xc] sm:$0xf]
    %v144 = vunpack.c.l.b16 %v136
    %v145 = vunpack.c.l.b16 %v137
    %v146 = vunpack.c.l.b16 %v138
    %v147 = vunpack.c.l.b16 %v139
    %v148 = vpack.c.b16 %v145, %v144
    %v149 = vpack.c.b16 %v147, %v146
    %v153 = vsel %vm88, %v131, 0
    %155 = vmatprep.subr.bf16.mxu0 0
    %156 = vmatpush1.bf16.msra.mxu0 0
    %157 = vmatprep.subr.bf16.mxu0 0
    %158 = vmatpush1.bf16.msra.mxu0 0
    %159 = vmatprep.subr.bf16.mxu0 0
    %160 = vmatpush1.bf16.msra.mxu0 0
    %161 = vmatprep.subr.bf16.mxu0 0
    %162 = vmatpush1.bf16.msra.mxu0 0
    %163 = vmatprep.subr.bf16.mxu0 0
    %164 = vmatpush1.bf16.msra.mxu0 0
    %165 = vmatprep.subr.bf16.mxu0 0
    %166 = vmatpush1.bf16.msra.mxu0 0
    %167 = vmatprep.subr.bf16.mxu0 0
    %168 = vmatpush1.bf16.msra.mxu0 %v149
    %169 = vmatprep.subr.bf16.mxu0 0
    %170 = vmatpush1.bf16.msra.mxu0 %v148
    %171 = vmatprep.subr.bf16.mxu0 0
    %172 = vmatpush2.bf16.msra.mxu0 0
    %173 = vmatprep.subr.bf16.mxu0 0
    %174 = vmatpush2.bf16.msra.mxu0 0
    %175 = vmatprep.subr.bf16.mxu0 0
    %176 = vmatpush2.bf16.msra.mxu0 0
    %177 = vmatprep.subr.bf16.mxu0 0
    %178 = vmatpush2.bf16.msra.mxu0 0
    %179 = vmatprep.subr.bf16.mxu0 0
    %180 = vmatpush2.bf16.msra.mxu0 0
    %181 = vmatprep.subr.bf16.mxu0 0
    %182 = vmatpush2.bf16.msra.mxu0 0
    %183 = vmatprep.subr.bf16.mxu0 0
    %184 = vmatpush2.bf16.msra.mxu0 0
    %185 = vmatprep.subr.bf16.mxu0 0
    %186 = vmatpush2.bf16.msra.mxu0 0
    %187 = vmatprep.mubr.bf16.mxu0 0
    %188 = vmatmul.mubr.bf16.gmra.mxu0 %v153
    %v189 = vpop.f32.mrf.mxu0
    %v190 = vadd.f32 0.0, %v189
    %v191 = vpop.f32.mrf.mxu0
    %v192 = vpop.f32.mrf.mxu0
    %v193 = vpop.f32.mrf.mxu0
    %194 = vdwg.mxu0
    %v199 = vunpack.c.l.b16 %v132
    %v200 = vunpack.c.l.b16 %v133
    %v201 = vunpack.c.l.b16 %v134
    %v202 = vunpack.c.l.b16 %v135
    %v203 = vpack.c.b16 %v200, %v199
    %v204 = vpack.c.b16 %v202, %v201
    %v208 = vsel %vm88, %v129, 0
    %210 = vmatprep.subr.bf16.mxu0 0
    %211 = vmatpush1.bf16.msra.mxu0 0
    %212 = vmatprep.subr.bf16.mxu0 0
    %213 = vmatpush1.bf16.msra.mxu0 0
    %214 = vmatprep.subr.bf16.mxu0 0
    %215 = vmatpush1.bf16.msra.mxu0 0
    %216 = vmatprep.subr.bf16.mxu0 0
    %217 = vmatpush1.bf16.msra.mxu0 0
    %218 = vmatprep.subr.bf16.mxu0 0
    %219 = vmatpush1.bf16.msra.mxu0 0
    %220 = vmatprep.subr.bf16.mxu0 0
    %221 = vmatpush1.bf16.msra.mxu0 0
    %222 = vmatprep.subr.bf16.mxu0 0
    %223 = vmatpush1.bf16.msra.mxu0 %v204
    %224 = vmatprep.subr.bf16.mxu0 0
    %225 = vmatpush1.bf16.msra.mxu0 %v203
    %226 = vmatprep.subr.bf16.mxu0 0
    %227 = vmatpush2.bf16.msra.mxu0 0
    %228 = vmatprep.subr.bf16.mxu0 0
    %229 = vmatpush2.bf16.msra.mxu0 0
    %230 = vmatprep.subr.bf16.mxu0 0
    %231 = vmatpush2.bf16.msra.mxu0 0
    %232 = vmatprep.subr.bf16.mxu0 0
    %233 = vmatpush2.bf16.msra.mxu0 0
    %234 = vmatprep.subr.bf16.mxu0 0
    %235 = vmatpush2.bf16.msra.mxu0 0
    %236 = vmatprep.subr.bf16.mxu0 0
    %237 = vmatpush2.bf16.msra.mxu0 0
    %238 = vmatprep.subr.bf16.mxu0 0
    %239 = vmatpush2.bf16.msra.mxu0 0
    %240 = vmatprep.subr.bf16.mxu0 0
    %241 = vmatpush2.bf16.msra.mxu0 0
    %242 = vmatprep.mubr.bf16.mxu0 0
    %243 = vmatmul.mubr.bf16.gmra.mxu0 %v208
    %v244 = vpop.f32.mrf.mxu0
    %v245 = vadd.f32 %v190, %v244
    %v246 = vpop.f32.mrf.mxu0
    %v247 = vpop.f32.mrf.mxu0
    %v248 = vpop.f32.mrf.mxu0
    %249 = vdwg.mxu0
    %v250 = vld [vmem:[%s6] sm:$0x1]
    %v252 = vlaneseq
    %v253 = vshrl.u32 %v252, 7
    %v254 = vsub.s32 0, %v253
    %v255 = vrot.slane %v250, %v254
    %v257 = vadd.f32 %v245, %v255
    %v258 = vmax.f32 %v257, 0.0
    %v259 = vpack.c.bf16 %v258, %v258
    %v260 = vld [vmem:[%s7] sm:$0xf]
    %v261 = vld [vmem:[%s7 + $0x4] sm:$0xf]
    %v262 = vld [vmem:[%s7 + $0x8] sm:$0xf]
    %v263 = vld [vmem:[%s7 + $0xc] sm:$0xf]
    %v264 = vld [vmem:[%s8] sm:$0x1]
    %v266 = vlaneseq
    %v267 = vshrl.u32 %v266, 7
    %v268 = vsub.s32 0, %v267
    %v269 = vrot.slane %v264, %v268
    %v275 = vunpack.c.l.b16 %v260
    %v276 = vunpack.c.l.b16 %v261
    %v277 = vunpack.c.l.b16 %v262
    %v278 = vunpack.c.l.b16 %v263
    %v279 = vpack.c.b16 %v276, %v275
    %v280 = vpack.c.b16 %v278, %v277
    %v284 = vsel %vm88, %v259, 0
    %286 = vmatprep.subr.bf16.mxu0 0
    %287 = vmatpush1.bf16.msra.mxu0 0
    %288 = vmatprep.subr.bf16.mxu0 0
    %289 = vmatpush1.bf16.msra.mxu0 0
    %290 = vmatprep.subr.bf16.mxu0 0
    %291 = vmatpush1.bf16.msra.mxu0 0
    %292 = vmatprep.subr.bf16.mxu0 0
    %293 = vmatpush1.bf16.msra.mxu0 0
    %294 = vmatprep.subr.bf16.mxu0 0
    %295 = vmatpush1.bf16.msra.mxu0 0
    %296 = vmatprep.subr.bf16.mxu0 0
    %297 = vmatpush1.bf16.msra.mxu0 0
    %298 = vmatprep.subr.bf16.mxu0 0
    %299 = vmatpush1.bf16.msra.mxu0 %v280
    %300 = vmatprep.subr.bf16.mxu0 0
    %301 = vmatpush1.bf16.msra.mxu0 %v279
    %302 = vmatprep.subr.bf16.mxu0 0
    %303 = vmatpush2.bf16.msra.mxu0 0
    %304 = vmatprep.subr.bf16.mxu0 0
    %305 = vmatpush2.bf16.msra.mxu0 0
    %306 = vmatprep.subr.bf16.mxu0 0
    %307 = vmatpush2.bf16.msra.mxu0 0
    %308 = vmatprep.subr.bf16.mxu0 0
    %309 = vmatpush2.bf16.msra.mxu0 0
    %310 = vmatprep.subr.bf16.mxu0 0
    %311 = vmatpush2.bf16.msra.mxu0 0
    %312 = vmatprep.subr.bf16.mxu0 0
    %313 = vmatpush2.bf16.msra.mxu0 0
    %314 = vmatprep.subr.bf16.mxu0 0
    %315 = vmatpush2.bf16.msra.mxu0 0
    %316 = vmatprep.subr.bf16.mxu0 0
    %317 = vmatpush2.bf16.msra.mxu0 0
    %318 = vmatprep.mubr.bf16.mxu0 0
    %319 = vmatmul.mubr.bf16.gmra.mxu0 %v284
    %v320 = vpop.f32.mrf.mxu0
    %v321 = vadd.f32 %v269, %v320
    %v322 = vpop.f32.mrf.mxu0
    %v323 = vpop.f32.mrf.mxu0
    %v324 = vpop.f32.mrf.mxu0
    %325 = vdwg.mxu0
    %vm326 = vcmask 64512
    %327 = vst.msk [vmem:[#allocation9] sm:$0xff] %vm326, %v321
    // Predicated region
    $region54: #{tpu_custom_call.1} parent=1 // pred_check
      _
    $region55: #{tpu_custom_call.1} parent=1 // pred_check_branch
      %329 = sbr.rel (0) target = $region57
    $region56: #{tpu_custom_call.1} parent=1 // pred_region
      %s331 = ssub.s32 128, 128
      %332 = vsyncadd [#allocation4], %s331
      %s334 = sshll.u32 [#allocation9], 4
      %s335 = int_to_ptr.vmem [resolvable:$true] %s334
      %337 = dma.vmem_to_hbm [thread:$0]  %s335, 128, %s10, [#allocation4]
    $region57: #{tpu_custom_call.1} parent=1 // pred_fallthru
      _
    // Predicated region
    $region58: #{tpu_custom_call.1} parent=1 // pred_check
      _
    $region59: #{tpu_custom_call.1} parent=1 // pred_check_branch
      %339 = sbr.rel (0) target = $region61
    $region60: #{tpu_custom_call.1} parent=1 // pred_region
      %340 = dma.done [#allocation4], 128
    $region61: #{tpu_custom_call.1} parent=1 // pred_fallthru
      _
    %341 = vsyncpa [#allocation3], 1
    %342 = vsyncpa [#allocation7], 1
    %343 = vsyncpa [#allocation4], 1
    %344 = vsyncpa [#allocation5], 1

</llo_original>
